<compile_context>
chip_gen: v7x
topology: tpu7x:2x2x1
jax: 0.10.0
libtpu: 0.0.40
codegen_flags: <defaults>
</compile_context>

<pallas_src>
import functools

import jax
import jax.numpy as jnp
from jax.experimental import pallas as pl
from jax.experimental.pallas import tpu as pltpu


def _round_up(a, b):
    return (a + b - 1) // b * b


def _is_pow2_chain(freqs):
    """True if freqs == (1, 2, 4, 8, ...) exactly (enables double-angle path)."""
    if len(freqs) == 0 or freqs[0] != 1.0:
        return False
    return all(freqs[i + 1] == 2.0 * freqs[i] for i in range(len(freqs) - 1))


def _vmem_capacity_bytes():
    try:
        info = pltpu.get_tpu_info()
        cap = getattr(info, "vmem_capacity_bytes", None)
        if cap:
            return int(cap)
    except Exception:
        pass
    return 64 * 1024 * 1024  # conservative default (v7x per-TC VMEM)


def _embed_kernel(x_ref, o_ref, *, freqs, include_input, use_double_angle,
                  anchor_every):
    # x_ref: (TILE_R, LANES)              -- lane-dense (8,128)-aligned tile.
    # o_ref: (num_parts, TILE_R, LANES)   -- one aligned slab per output part.
    x = x_ref[...].astype(jnp.float32)
    p = 0
    if include_input:
        o_ref[p] = x.astype(o_ref.dtype)
        p += 1
    if use_double_angle:
        # EUP offload: direct sin/cos only every `anchor_every` octaves (bounds
        # the compounding error); intermediate octaves come from the 4-wide VPU
        # via the double-angle recurrence.  Valid because freqs are 1,2,4,8,...
        s = c = None
        for i, f in enumerate(freqs):
            if i % anchor_every == 0:
                xf = x if f == 1.0 else x * f
                s, c = jnp.sin(xf), jnp.cos(xf)
            else:
                s, c = 2.0 * s * c, 1.0 - 2.0 * s * s
            o_ref[p] = s.astype(o_ref.dtype)
            o_ref[p + 1] = c.astype(o_ref.dtype)
            p += 2
    else:
        for f in freqs:  # static Python floats -> fully unrolled
            xf = x * f
            o_ref[p] = jnp.sin(xf).astype(o_ref.dtype)
            o_ref[p + 1] = jnp.cos(xf).astype(o_ref.dtype)
            p += 2


def make_embedder(input_dims, num_freqs, max_freq_log2, *, include_input=True,
                  log_sampling=True, out_dtype=None, use_double_angle=None,
                  anchor_every=4, max_lanes=2048, vmem_budget_bytes=None):
    """Returns (embed_fn, out_dim).

    embed_fn(x)                    -> (N, out_dim)        (torch layout, default)
    embed_fn(x, parts_layout=True) -> (num_parts, N, D)   (no epilogue transpose)
    """
    if log_sampling:
        freq_bands = 2.0 ** jnp.linspace(0.0, float(max_freq_log2), num_freqs)
    else:
        freq_bands = jnp.linspace(2.0 ** 0.0, 2.0 ** float(max_freq_log2), num_freqs)
    freqs = tuple(float(f) for f in freq_bands)  # static constants baked into kernel

    num_parts = int(include_input) + 2 * num_freqs
    out_dim = input_dims * num_parts

    # Double-angle recurrence is on by default when the bands are exact
    # consecutive powers of two; an explicit False disables it, an explicit True
    # is still gated on the pow2 chain (correctness first).
    pow2 = _is_pow2_chain(freqs)
    use_rec = pow2 if use_double_angle is None else (bool(use_double_angle) and pow2)
    anchor_every = max(1, int(anchor_every))
    n_anchors = -(-num_freqs // anchor_every) if use_rec else num_freqs

    kernel = functools.partial(_embed_kernel, freqs=freqs,
                               include_input=include_input,
                               use_double_angle=use_rec,
                               anchor_every=anchor_every)

    vmem_cap = _vmem_capacity_bytes()
    budget = (vmem_budget_bytes if vmem_budget_bytes is not None
              else min(24 << 20, vmem_cap // 3))

    def _embed_impl(x, parts_layout=False):
        N, D = x.shape
        assert D == input_dims, (D, input_dims)
        in_dt = jnp.dtype(x.dtype)
        odt = jnp.dtype(out_dtype) if out_dtype is not None else in_dt
        total = N * D
        bytes_per_elem = in_dt.itemsize + num_parts * odt.itemsize
        # Sublane packing for unmasked stores: 8 (f32), 16 (bf16), 32 (8-bit).
        sub = max(8 * max(1, 4 // in_dt.itemsize), 8 * max(1, 4 // odt.itemsize))

        # --- Lane-dense layout without an extra pad pass over the input. ---
        padded = False
        if total % 128 == 0:
            divs = [128 * m for m in range(1, min(max_lanes // 128, total // 128) + 1)
                    if total % (128 * m) == 0]
            fitting = [l for l in divs if 2 * sub * l * bytes_per_elem <= budget]
            lanes = max(fitting) if fitting else min(divs)
            x2d = x.reshape(total // lanes, lanes)  # free (contiguous) reshape
        else:
            # TODO(synk): ragged tail costs one extra pad pass over the input;
            # only hit when N*input_dims is not a multiple of 128.
            lanes = 128
            rows_ = pl.cdiv(total, lanes)
            flat = jnp.pad(x.reshape(total), (0, rows_ * lanes - total))
            x2d = flat.reshape(rows_, lanes)
            padded = True
        rows = x2d.shape[0]

        # --- Tile rows from the VMEM budget (double-buffered in/out blocks
        #     plus ~4 tile-sized f32 temporaries), capped at 512 sublanes. ---
        per_row = lanes * bytes_per_elem + 4 * lanes * 4
        tile_rows = max(sub, min(512, (budget // (2 * per_row)) // sub * sub))
        # Keep >= 4 grid steps so ("parallel",) can shard across v7x's 2 TCs.
        if rows >= 4 * sub:
            tile_rows = min(tile_rows, _round_up(pl.cdiv(rows, 4), sub))
        if rows < sub:
            tile_rows = rows  # full-extent block (allowed)
        else:
            tile_rows = min(tile_rows, (rows // sub) * sub)
        grid = (pl.cdiv(rows, tile_rows),)

        tile_elems = tile_rows * lanes
        used = tile_elems * (2 * in_dt.itemsize + 2 * num_parts * odt.itemsize + 16)
        vmem_limit = int(min(vmem_cap, max(used + (2 << 20), 16 << 20)))

        cost = pl.CostEstimate(
            flops=int(total * num_freqs * 4),
            transcendentals=int(2 * n_anchors * total),
            bytes_accessed=int(total * in_dt.itemsize
                               + total * num_parts * odt.itemsize),
        )

        out3 = pl.pallas_call(
            kernel,
            out_shape=jax.ShapeDtypeStruct((num_parts, rows, lanes), odt),
            grid_spec=pltpu.PrefetchScalarGridSpec(
                num_scalar_prefetch=0,
                grid=grid,
                in_specs=[pl.BlockSpec((tile_rows, lanes), lambda i: (i, 0))],
                out_specs=pl.BlockSpec((num_parts, tile_rows, lanes),
                                       lambda i: (0, i, 0)),
            ),
            compiler_params=pltpu.CompilerParams(
                dimension_semantics=("parallel",),
                vmem_limit_bytes=vmem_limit),
            cost_estimate=cost,
        )(x2d)

        parts = out3.reshape(num_parts, rows * lanes)
        if padded:
            parts = parts[:, :total]
        parts = parts.reshape(num_parts, N, D)
        if parts_layout:
            # Parts-major slab: no epilogue transpose.  A downstream MLP can
            # consume it via einsum('pnd,pdh->nh', parts, W.reshape(P, D, H)).
            return parts
        # Torch layout (N, out_dim): free reshape + one XLA transpose
        # (layout plumbing only; prefer parts_layout=True when fusing).
        return jnp.transpose(parts, (1, 0, 2)).reshape(N, out_dim)

    embed = jax.jit(_embed_impl, static_argnames=("parts_layout",))
    return embed, out_dim


def _reference_embed(x, num_freqs, max_freq_log2, include_input=True,
                     log_sampling=True):
    if log_sampling:
        freq_bands = 2.0 ** jnp.linspace(0.0, float(max_freq_log2), num_freqs)
    else:
        freq_bands = jnp.linspace(2.0 ** 0.0, 2.0 ** float(max_freq_log2), num_freqs)
    parts = []
    if include_input:
        parts.append(x)
    for f in freq_bands:
        parts.append(jnp.sin(x * f))
        parts.append(jnp.cos(x * f))
    return jnp.concatenate(parts, axis=-1)


if __name__ == "__main__":
    # Typical NeRF config at small scale: 3-D points, 4 frequency octaves.
    input_dims = 3
    num_freqs = 4
    max_freq_log2 = num_freqs - 1  # standard NeRF convention
    N = 256

    key = jax.random.PRNGKey(0)
    x = jax.random.uniform(key, (N, input_dims), dtype=jnp.float32,
                           minval=-1.0, maxval=1.0)

    ref = _reference_embed(x, num_freqs, max_freq_log2)

    # Default path (auto double-angle recurrence with re-anchoring).
    embed, out_dim = make_embedder(input_dims, num_freqs, max_freq_log2)
    out = jax.block_until_ready(embed(x))
    assert out.shape == (N, out_dim) == ref.shape, (out.shape, ref.shape)
    assert jnp.allclose(out, ref, atol=2e-5, rtol=1e-5), "mismatch vs reference"

    # Parts-major slab (no epilogue transpose) for fused consumers.
    parts = jax.block_until_ready(embed(x, parts_layout=True))
    num_parts = 1 + 2 * num_freqs
    ref_parts = jnp.transpose(ref.reshape(N, num_parts, input_dims), (1, 0, 2))
    assert parts.shape == (num_parts, N, input_dims)
    assert jnp.allclose(parts, ref_parts, atol=2e-5, rtol=1e-5), "parts mismatch"

    # Direct sin/cos path (recurrence disabled).
    embed_direct, _ = make_embedder(input_dims, num_freqs, max_freq_log2,
                                    use_double_angle=False)
    out_direct = jax.block_until_ready(embed_direct(x))
    assert jnp.allclose(out_direct, ref, atol=1e-5, rtol=1e-5), "direct mismatch"

    # bf16-output variant (halves HBM write traffic; compute stays f32).
    embed_bf16, _ = make_embedder(input_dims, num_freqs, max_freq_log2,
                                  out_dtype=jnp.bfloat16)
    out_bf16 = jax.block_until_ready(embed_bf16(x))
    assert out_bf16.dtype == jnp.bfloat16
    assert jnp.allclose(out_bf16.astype(jnp.float32), ref, atol=1e-2, rtol=1e-2)

    # NeRF-standard 10 octaves with a ragged N (exercises pad fallback path
    # and the anchored double-angle recurrence accuracy at full depth).
    nf10 = 10
    x10 = jax.random.uniform(jax.random.PRNGKey(0), (1000, input_dims),
                             dtype=jnp.float32, minval=-1.0, maxval=1.0)
    ref10 = _reference_embed(x10, nf10, nf10 - 1)
    embed10, out_dim10 = make_embedder(input_dims, nf10, nf10 - 1)
    out10 = jax.block_until_ready(embed10(x10))
    assert out10.shape == (1000, out_dim10) == ref10.shape
    assert jnp.allclose(out10, ref10, atol=1e-4, rtol=1e-4), "10-octave mismatch"

    print("KERNEL_OK")
</pallas_src>

<mosaic_0001>
module attributes {stable_mosaic.version = 11 : i64} {
  func.func @_embed_kernel(%arg0: i32, %arg1: memref<1x768xf32, #tpu.memory_space<vmem>>, %arg2: memref<9x1x768xf32, #tpu.memory_space<vmem>>) attributes {dimension_semantics = [#tpu.dimension_semantics<parallel>], iteration_bounds = array<i64: 1>, scalar_prefetch = 0 : i64, scratch_operands = 0 : i64, tpu.core_type = #tpu.core_type<tc>, window_params = [{transform_indices = @transform_0, window_bounds = array<i64: 1, 768>}, {transform_indices = @transform_1, window_bounds = array<i64: 9, 1, 768>}]} {
    %c0 = arith.constant 0 : index
    %c0_0 = arith.constant 0 : index
    %0 = vector.load %arg1[%c0, %c0_0] : memref<1x768xf32, #tpu.memory_space<vmem>>, vector<1x768xf32>
    %c0_1 = arith.constant 0 : index
    %c0_2 = arith.constant 0 : index
    %c0_3 = arith.constant 0 : index
    %1 = vector.load %arg2[%c0_1, %c0_2, %c0_3] : memref<9x1x768xf32, #tpu.memory_space<vmem>>, vector<1x1x768xf32>
    %2 = vector.shape_cast %1 : vector<1x1x768xf32> to vector<1x768xf32>
    %3 = vector.shape_cast %0 : vector<1x768xf32> to vector<1x1x768xf32>
    tpu.vector_store %arg2[%c0_1, %c0_2, %c0_3], %3 {strides = array<i32>} : memref<9x1x768xf32, #tpu.memory_space<vmem>>, vector<1x1x768xf32>,
    %4 = math.sin %0 : vector<1x768xf32>
    %5 = math.cos %0 : vector<1x768xf32>
    %c1 = arith.constant 1 : index
    %c0_4 = arith.constant 0 : index
    %c0_5 = arith.constant 0 : index
    %6 = vector.load %arg2[%c1, %c0_4, %c0_5] : memref<9x1x768xf32, #tpu.memory_space<vmem>>, vector<1x1x768xf32>
    %7 = vector.shape_cast %6 : vector<1x1x768xf32> to vector<1x768xf32>
    %8 = vector.shape_cast %4 : vector<1x768xf32> to vector<1x1x768xf32>
    tpu.vector_store %arg2[%c1, %c0_4, %c0_5], %8 {strides = array<i32>} : memref<9x1x768xf32, #tpu.memory_space<vmem>>, vector<1x1x768xf32>,
    %c2 = arith.constant 2 : index
    %c0_6 = arith.constant 0 : index
    %c0_7 = arith.constant 0 : index
    %9 = vector.load %arg2[%c2, %c0_6, %c0_7] : memref<9x1x768xf32, #tpu.memory_space<vmem>>, vector<1x1x768xf32>
    %10 = vector.shape_cast %9 : vector<1x1x768xf32> to vector<1x768xf32>
    %11 = vector.shape_cast %5 : vector<1x768xf32> to vector<1x1x768xf32>
    tpu.vector_store %arg2[%c2, %c0_6, %c0_7], %11 {strides = array<i32>} : memref<9x1x768xf32, #tpu.memory_space<vmem>>, vector<1x1x768xf32>,
    %cst = arith.constant 2.000000e+00 : f32
    %12 = vector.broadcast %cst : f32 to vector<1x768xf32>
    %13 = arith.mulf %12, %4 : vector<1x768xf32>
    %14 = arith.mulf %13, %5 : vector<1x768xf32>
    %cst_8 = arith.constant 2.000000e+00 : f32
    %15 = vector.broadcast %cst_8 : f32 to vector<1x768xf32>
    %16 = arith.mulf %15, %4 : vector<1x768xf32>
    %17 = arith.mulf %16, %4 : vector<1x768xf32>
    %cst_9 = arith.constant 1.000000e+00 : f32
    %18 = vector.broadcast %cst_9 : f32 to vector<1x768xf32>
    %19 = arith.subf %18, %17 : vector<1x768xf32>
    %c3 = arith.constant 3 : index
    %c0_10 = arith.constant 0 : index
    %c0_11 = arith.constant 0 : index
    %20 = vector.load %arg2[%c3, %c0_10, %c0_11] : memref<9x1x768xf32, #tpu.memory_space<vmem>>, vector<1x1x768xf32>
    %21 = vector.shape_cast %20 : vector<1x1x768xf32> to vector<1x768xf32>
    %22 = vector.shape_cast %14 : vector<1x768xf32> to vector<1x1x768xf32>
    tpu.vector_store %arg2[%c3, %c0_10, %c0_11], %22 {strides = array<i32>} : memref<9x1x768xf32, #tpu.memory_space<vmem>>, vector<1x1x768xf32>,
    %c4 = arith.constant 4 : index
    %c0_12 = arith.constant 0 : index
    %c0_13 = arith.constant 0 : index
    %23 = vector.load %arg2[%c4, %c0_12, %c0_13] : memref<9x1x768xf32, #tpu.memory_space<vmem>>, vector<1x1x768xf32>
    %24 = vector.shape_cast %23 : vector<1x1x768xf32> to vector<1x768xf32>
    %25 = vector.shape_cast %19 : vector<1x768xf32> to vector<1x1x768xf32>
    tpu.vector_store %arg2[%c4, %c0_12, %c0_13], %25 {strides = array<i32>} : memref<9x1x768xf32, #tpu.memory_space<vmem>>, vector<1x1x768xf32>,
    %cst_14 = arith.constant 2.000000e+00 : f32
    %26 = vector.broadcast %cst_14 : f32 to vector<1x768xf32>
    %27 = arith.mulf %26, %14 : vector<1x768xf32>
    %28 = arith.mulf %27, %19 : vector<1x768xf32>
    %cst_15 = arith.constant 2.000000e+00 : f32
    %29 = vector.broadcast %cst_15 : f32 to vector<1x768xf32>
    %30 = arith.mulf %29, %14 : vector<1x768xf32>
    %31 = arith.mulf %30, %14 : vector<1x768xf32>
    %cst_16 = arith.constant 1.000000e+00 : f32
    %32 = vector.broadcast %cst_16 : f32 to vector<1x768xf32>
    %33 = arith.subf %32, %31 : vector<1x768xf32>
    %c5 = arith.constant 5 : index
    %c0_17 = arith.constant 0 : index
    %c0_18 = arith.constant 0 : index
    %34 = vector.load %arg2[%c5, %c0_17, %c0_18] : memref<9x1x768xf32, #tpu.memory_space<vmem>>, vector<1x1x768xf32>
    %35 = vector.shape_cast %34 : vector<1x1x768xf32> to vector<1x768xf32>
    %36 = vector.shape_cast %28 : vector<1x768xf32> to vector<1x1x768xf32>
    tpu.vector_store %arg2[%c5, %c0_17, %c0_18], %36 {strides = array<i32>} : memref<9x1x768xf32, #tpu.memory_space<vmem>>, vector<1x1x768xf32>,
    %c6 = arith.constant 6 : index
    %c0_19 = arith.constant 0 : index
    %c0_20 = arith.constant 0 : index
    %37 = vector.load %arg2[%c6, %c0_19, %c0_20] : memref<9x1x768xf32, #tpu.memory_space<vmem>>, vector<1x1x768xf32>
    %38 = vector.shape_cast %37 : vector<1x1x768xf32> to vector<1x768xf32>
    %39 = vector.shape_cast %33 : vector<1x768xf32> to vector<1x1x768xf32>
    tpu.vector_store %arg2[%c6, %c0_19, %c0_20], %39 {strides = array<i32>} : memref<9x1x768xf32, #tpu.memory_space<vmem>>, vector<1x1x768xf32>,
    %cst_21 = arith.constant 2.000000e+00 : f32
    %40 = vector.broadcast %cst_21 : f32 to vector<1x768xf32>
    %41 = arith.mulf %40, %28 : vector<1x768xf32>
    %42 = arith.mulf %41, %33 : vector<1x768xf32>
    %cst_22 = arith.constant 2.000000e+00 : f32
    %43 = vector.broadcast %cst_22 : f32 to vector<1x768xf32>
    %44 = arith.mulf %43, %28 : vector<1x768xf32>
    %45 = arith.mulf %44, %28 : vector<1x768xf32>
    %cst_23 = arith.constant 1.000000e+00 : f32
    %46 = vector.broadcast %cst_23 : f32 to vector<1x768xf32>
    %47 = arith.subf %46, %45 : vector<1x768xf32>
    %c7 = arith.constant 7 : index
    %c0_24 = arith.constant 0 : index
    %c0_25 = arith.constant 0 : index
    %48 = vector.load %arg2[%c7, %c0_24, %c0_25] : memref<9x1x768xf32, #tpu.memory_space<vmem>>, vector<1x1x768xf32>
    %49 = vector.shape_cast %48 : vector<1x1x768xf32> to vector<1x768xf32>
    %50 = vector.shape_cast %42 : vector<1x768xf32> to vector<1x1x768xf32>
    tpu.vector_store %arg2[%c7, %c0_24, %c0_25], %50 {strides = array<i32>} : memref<9x1x768xf32, #tpu.memory_space<vmem>>, vector<1x1x768xf32>,
    %c8 = arith.constant 8 : index
    %c0_26 = arith.constant 0 : index
    %c0_27 = arith.constant 0 : index
    %51 = vector.load %arg2[%c8, %c0_26, %c0_27] : memref<9x1x768xf32, #tpu.memory_space<vmem>>, vector<1x1x768xf32>
    %52 = vector.shape_cast %51 : vector<1x1x768xf32> to vector<1x768xf32>
    %53 = vector.shape_cast %47 : vector<1x768xf32> to vector<1x1x768xf32>
    tpu.vector_store %arg2[%c8, %c0_26, %c0_27], %53 {strides = array<i32>} : memref<9x1x768xf32, #tpu.memory_space<vmem>>, vector<1x1x768xf32>,
    return
  }
  func.func @transform_0(%arg0: i32) -> (i32, i32) {
    %c0_i32 = arith.constant 0 : i32
    %c0_i32_0 = arith.constant 0 : i32
    return %arg0, %c0_i32 : i32, i32
  }
  func.func @transform_1(%arg0: i32) -> (i32, i32, i32) {
    %c0_i32 = arith.constant 0 : i32
    %c0_i32_0 = arith.constant 0 : i32
    %c0_i32_1 = arith.constant 0 : i32
    return %c0_i32, %arg0, %c0_i32_0 : i32, i32, i32
  }
}

</mosaic_0001>

<llo_original>
// kernel: _embed_impl.1
$region0: #{_embed_impl.1}
  #allocation0 [shape = 'u32[]', space=smem, size = 0x4, offset = 0x4, fixed_abs, tag = 'smem constant byte address 0x4 - core index']
  #allocation1 [shape = 'u32[144,128]{1,0:T(1,128)}', space=vmem, size = 0x12000, scoped, tag = 'internal scratch']
  %s0 = inlined_call_operand.vmem [shape: f32[1,768], index: 0, kind: input, shape index: {}]
  %s1 = inlined_call_operand.vmem [shape: f32[9,1,768], index: 1, kind: output, shape index: {}]
  %s2 = sld [smem:[#allocation0]]
  $region14: #{_embed_impl.1} parent=0
    _
  %s4 = ssub.s32 1, %s2
  %s5 = scalar_select 0, %s4, %s2
  // Predicated region
  $region2: #{_embed_impl.1} parent=0 // pred_check
    _
  $region3: #{_embed_impl.1} parent=0 // pred_check_branch
    %7 = sbr.rel (0) target = $region5
  $region4: #{_embed_impl.1} parent=0 // pred_region
    _
  $region5: #{_embed_impl.1} parent=0 // pred_fallthru
    _
  %v8 = vld [vmem:[%s0] sm:$0x3f]
  %v9 = vlaneseq
  %vm10 = vcmp.ge.s32.totalorder %v9, 0
  %vm11 = vcmp.lt.s32.totalorder %v9, 768
  %vm12 = vmand %vm10, %vm11
  %13 = vst.msk [vmem:[%s1] sm:$0x3f] %vm12, %v8
  %v14 = vand.u32 2147483647, %v8
  %vm15 = vcmp.le.f32.partialorder %v14, 0.7853982
  %vm16 = vcmp.lt.s32.totalorder %v8, 0
  %v17 = vand.u32 %v8, 2139095040
  %v18 = vshrl.u32 %v17, 23
  %v19 = vsub.s32 %v18, 127
  %v20 = vand.u32 2147483647, %v8
  %v21 = vand.u32 %v20, 8388607
  %v22 = vor.u32 %v21, 8388608
  %v23 = vsub.s32 0, %v22
  %v24 = vadd.s32 %v19, 1
  %vm25 = vcmp.gt.s32.totalorder %v24, 0
  %v26 = vsel %vm25, %v24, 0
  %v27 = vshrl.u32 %v26, 5
  %v28 = vand.u32 %v26, 31
  %v29 = vsub.s32 32, %v28
  %v30 = vshrl.u32 683565275, %v29
  %v31 = vshll.u32 683565275, %v28
  %v32 = vshrl.u32 2475754826, %v29
  %v33 = vor.u32 %v31, %v32
  %v34 = vshll.u32 2475754826, %v28
  %v35 = vshrl.u32 2131351028, %v29
  %v36 = vor.u32 %v34, %v35
  %v37 = vshll.u32 2131351028, %v28
  %v38 = vshrl.u32 2102212464, %v29
  %v39 = vor.u32 %v37, %v38
  %v40 = vshll.u32 2102212464, %v28
  %v41 = vshrl.u32 920167782, %v29
  %v42 = vor.u32 %v40, %v41
  %v43 = vshll.u32 920167782, %v28
  %v44 = vshrl.u32 1326507024, %v29
  %v45 = vor.u32 %v43, %v44
  %vm46 = vcmp.lt.s32.totalorder %v27, 1
  %vm47 = vcmp.lt.s32.totalorder %v27, 2
  %vm48 = vcmp.lt.s32.totalorder %v27, 3
  %vm49 = vcmp.lt.s32.totalorder %v27, 4
  %v50 = vsel %vm46, %v30, %v33
  %v51 = vsel %vm49, %v39, 2102212464
  %v52 = vsel %vm48, %v36, %v51
  %v53 = vsel %vm47, %v50, %v52
  %v54 = vsel %vm46, %v33, %v36
  %v55 = vsel %vm49, %v42, 920167782
  %v56 = vsel %vm48, %v39, %v55
  %v57 = vsel %vm47, %v54, %v56
  %v58 = vsel %vm46, %v36, %v39
  %v59 = vsel %vm49, %v45, 1326507024
  %v60 = vsel %vm48, %v42, %v59
  %v61 = vsel %vm47, %v58, %v60
  %v62 = vshll.u32 %v22, 8
  %v63 = vmul.u32.u64.compose %v62, %v61
  %v64 = vextract.low.u32 %v63
  %v65 = vextract.high.u32 %v63
  %v66 = vmul.u32.u64.compose %v62, %v57
  %v67 = vextract.low.u32 %v66
  %v68 = vextract.high.u32 %v66
  %v69 = vmul.u32 %v62, %v53
  %v70 = vadd.s32 %v65, %v67
  %vm71 = vc.u32 %v65, %v67
  %v72 = vadd.s32 %v68, 1
  %v73 = vsel %vm71, %v72, %v68
  %v74 = vadd.s32 %v69, %v73
  %v75 = vadd.s32 %v74, 536870912
  %v76 = vshrl.u32 %v75, 30
  %v77 = vshll.u32 %v76, 30
  %v78 = vsub.s32 %v74, %v77
  %vm79 = vcmp.lt.s32.totalorder %v78, 0
  %v80 = vsub.s32 0, %v78
  %v81 = vsel %vm79, %v80, %v78
  %v82 = vclz %v81
  %v83 = vsub.s32 %v82, 2
  %vm84 = vcmp.gt.s32.totalorder 0, %v83
  %v85 = vsel %vm84, 0, %v83
  %v86 = vsub.s32 32, %v85
  %v87 = vshll.u32 %v78, %v85
  %v88 = vshrl.u32 %v70, %v86
  %v89 = vor.u32 %v87, %v88
  %v90 = vsub.s32 4294967266, %v85
  %v91 = vadd.s32 %v90, 127
  %v92 = vshll.u32 %v91, 23
  %v93 = vor.u32 4788187, %v92
  %v94 = vand.u32 2147483647, %v93
  %v96 = vcvt.s32.f32 %v89
  %v97 = vmul.f32 %v96, %v94
  %v98 = vxor.u32 %v97, 2147483648
  %v99 = vsel %vm16, %v98, %v97
  %v100 = vsub.s32 4, %v76
  %v101 = vsel %vm16, %v100, %v76
  %v102 = vsel %vm15, %v8, %v99
  %v103 = vsel %vm15, 0, %v101
  %v104 = vcosq.f32.pop %v102
  %v105 = vsinq.f32.pop %v102
  %vm106 = vweird.f32 %v8
  %v107 = vadd.s32 %v103, 3
  %v108 = vand.u32 %v107, 3
  %vm109 = vcmp.lt.s32.totalorder %v108, 2
  %vm110 = vcmp.eq.s32.totalorder %v108, 0
  %v111 = vxor.u32 %v105, 2147483648
  %v112 = vsel %vm110, %v104, %v111
  %vm113 = vcmp.eq.s32.totalorder %v108, 2
  %v114 = vxor.u32 %v104, 2147483648
  %v115 = vsel %vm113, %v114, %v105
  %v116 = vsel %vm109, %v112, %v115
  %v117 = vsel %vm106, nan, %v116
  %v118 = vand.u32 2147483647, %v8
  %vm119 = vcmp.le.f32.partialorder %v118, 0.7853982
  %vm120 = vcmp.lt.s32.totalorder %v8, 0
  %v121 = vand.u32 %v8, 2139095040
  %v122 = vshrl.u32 %v121, 23
  %v123 = vsub.s32 %v122, 127
  %v124 = vand.u32 2147483647, %v8
  %v125 = vand.u32 %v124, 8388607
  %v126 = vor.u32 %v125, 8388608
  %v127 = vsub.s32 0, %v126
  %v128 = vadd.s32 %v123, 1
  %vm129 = vcmp.gt.s32.totalorder %v128, 0
  %v130 = vsel %vm129, %v128, 0
  %v131 = vshrl.u32 %v130, 5
  %v132 = vand.u32 %v130, 31
  %v133 = vsub.s32 32, %v132
  %v134 = vshrl.u32 683565275, %v133
  %v135 = vshll.u32 683565275, %v132
  %v136 = vshrl.u32 2475754826, %v133
  %v137 = vor.u32 %v135, %v136
  %v138 = vshll.u32 2475754826, %v132
  %v139 = vshrl.u32 2131351028, %v133
  %v140 = vor.u32 %v138, %v139
  %v141 = vshll.u32 2131351028, %v132
  %v142 = vshrl.u32 2102212464, %v133
  %v143 = vor.u32 %v141, %v142
  %v144 = vshll.u32 2102212464, %v132
  %v145 = vshrl.u32 920167782, %v133
  %v146 = vor.u32 %v144, %v145
  %v147 = vshll.u32 920167782, %v132
  %v148 = vshrl.u32 1326507024, %v133
  %v149 = vor.u32 %v147, %v148
  %vm150 = vcmp.lt.s32.totalorder %v131, 1
  %vm151 = vcmp.lt.s32.totalorder %v131, 2
  %vm152 = vcmp.lt.s32.totalorder %v131, 3
  %vm153 = vcmp.lt.s32.totalorder %v131, 4
  %v154 = vsel %vm150, %v134, %v137
  %v155 = vsel %vm153, %v143, 2102212464
  %v156 = vsel %vm152, %v140, %v155
  %v157 = vsel %vm151, %v154, %v156
  %v158 = vsel %vm150, %v137, %v140
  %v159 = vsel %vm153, %v146, 920167782
  %v160 = vsel %vm152, %v143, %v159
  %v161 = vsel %vm151, %v158, %v160
  %v162 = vsel %vm150, %v140, %v143
  %v163 = vsel %vm153, %v149, 1326507024
  %v164 = vsel %vm152, %v146, %v163
  %v165 = vsel %vm151, %v162, %v164
  %v166 = vshll.u32 %v126, 8
  %v167 = vmul.u32.u64.compose %v166, %v165
  %v168 = vextract.low.u32 %v167
  %v169 = vextract.high.u32 %v167
  %v170 = vmul.u32.u64.compose %v166, %v161
  %v171 = vextract.low.u32 %v170
  %v172 = vextract.high.u32 %v170
  %v173 = vmul.u32 %v166, %v157
  %v174 = vadd.s32 %v169, %v171
  %vm175 = vc.u32 %v169, %v171
  %v176 = vadd.s32 %v172, 1
  %v177 = vsel %vm175, %v176, %v172
  %v178 = vadd.s32 %v173, %v177
  %v179 = vadd.s32 %v178, 536870912
  %v180 = vshrl.u32 %v179, 30
  %v181 = vshll.u32 %v180, 30
  %v182 = vsub.s32 %v178, %v181
  %vm183 = vcmp.lt.s32.totalorder %v182, 0
  %v184 = vsub.s32 0, %v182
  %v185 = vsel %vm183, %v184, %v182
  %v186 = vclz %v185
  %v187 = vsub.s32 %v186, 2
  %vm188 = vcmp.gt.s32.totalorder 0, %v187
  %v189 = vsel %vm188, 0, %v187
  %v190 = vsub.s32 32, %v189
  %v191 = vshll.u32 %v182, %v189
  %v192 = vshrl.u32 %v174, %v190
  %v193 = vor.u32 %v191, %v192
  %v194 = vsub.s32 4294967266, %v189
  %v195 = vadd.s32 %v194, 127
  %v196 = vshll.u32 %v195, 23
  %v197 = vor.u32 4788187, %v196
  %v198 = vand.u32 2147483647, %v197
  %v200 = vcvt.s32.f32 %v193
  %v201 = vmul.f32 %v200, %v198
  %v202 = vxor.u32 %v201, 2147483648
  %v203 = vsel %vm120, %v202, %v201
  %v204 = vsub.s32 4, %v180
  %v205 = vsel %vm120, %v204, %v180
  %v206 = vsel %vm119, %v8, %v203
  %v207 = vsel %vm119, 0, %v205
  %v208 = vcosq.f32.pop %v206
  %v209 = vsinq.f32.pop %v206
  %vm210 = vweird.f32 %v8
  %v211 = vand.u32 %v207, 3
  %vm212 = vcmp.lt.s32.totalorder %v211, 2
  %vm213 = vcmp.eq.s32.totalorder %v211, 0
  %v214 = vxor.u32 %v209, 2147483648
  %v215 = vsel %vm213, %v208, %v214
  %vm216 = vcmp.eq.s32.totalorder %v211, 2
  %v217 = vxor.u32 %v208, 2147483648
  %v218 = vsel %vm216, %v217, %v209
  %v219 = vsel %vm212, %v215, %v218
  %v220 = vsel %vm210, nan, %v219
  %s221 = scalar_lea.vmem %s1, 6
  %222 = vst.msk [vmem:[%s221] sm:$0x3f] %vm12, %v117
  %s223 = scalar_lea.vmem %s1, 12
  %224 = vst.msk [vmem:[%s223] sm:$0x3f] %vm12, %v220
  %v225 = vmul.f32 %v117, 2.0
  %v226 = vmul.f32 %v225, %v220
  %v227 = vmul.f32 %v225, %v117
  %v228 = vsub.f32 1.0, %v227
  %s229 = scalar_lea.vmem %s1, 18
  %230 = vst.msk [vmem:[%s229] sm:$0x3f] %vm12, %v226
  %s231 = scalar_lea.vmem %s1, 24
  %232 = vst.msk [vmem:[%s231] sm:$0x3f] %vm12, %v228
  %v233 = vmul.f32 %v226, 2.0
  %v234 = vmul.f32 %v233, %v228
  %v235 = vmul.f32 %v233, %v226
  %v236 = vsub.f32 1.0, %v235
  %s237 = scalar_lea.vmem %s1, 30
  %238 = vst.msk [vmem:[%s237] sm:$0x3f] %vm12, %v234
  %s239 = scalar_lea.vmem %s1, 36
  %240 = vst.msk [vmem:[%s239] sm:$0x3f] %vm12, %v236
  %v241 = vmul.f32 %v234, 2.0
  %v242 = vmul.f32 %v241, %v236
  %v243 = vmul.f32 %v241, %v234
  %v244 = vsub.f32 1.0, %v243
  %s245 = scalar_lea.vmem %s1, 42
  %246 = vst.msk [vmem:[%s245] sm:$0x3f] %vm12, %v242
  %s247 = scalar_lea.vmem %s1, 48
  %248 = vst.msk [vmem:[%s247] sm:$0x3f] %vm12, %v244
  // Predicated region
  $region6: #{_embed_impl.1} parent=0 // pred_check
    _
  $region7: #{_embed_impl.1} parent=0 // pred_check_branch
    %250 = sbr.rel (0) target = $region9
  $region8: #{_embed_impl.1} parent=0 // pred_region
    _
  $region9: #{_embed_impl.1} parent=0 // pred_fallthru
    _
  // Predicated region
  $region10: #{_embed_impl.1} parent=0 // pred_check
    _
  $region11: #{_embed_impl.1} parent=0 // pred_check_branch
    %252 = sbr.rel (0) target = $region13
  $region12: #{_embed_impl.1} parent=0 // pred_region
    _
  $region13: #{_embed_impl.1} parent=0 // pred_fallthru
    _

</llo_original>
